<compile_context>
chip_gen: v5e
topology: v5e:2x2
jax: 0.10.0
libtpu: 0.0.40
codegen_flags: <defaults>
</compile_context>

<pallas_src>
import functools

import jax
import jax.numpy as jnp
from jax.experimental import pallas as pl
from jax.experimental.pallas import tpu as pltpu


def _round_up(n, m):
    return ((n + m - 1) // m) * m


def _tpu_vmem_capacity_bytes():
    try:
        return int(pltpu.get_tpu_info().vmem_capacity_bytes)
    except Exception:                 # non-TPU / older jax: be conservative
        return 64 * 2**20             # v7x-sized assumption


def _vmem_budget_bytes():
    # ~25% headroom for compiler-internal scratch and spill buffers:
    # v7x (64 MiB/TC) -> 48 MiB, v5e/v6e (128 MiB) -> 96 MiB.
    return (_tpu_vmem_capacity_bytes() * 3) // 4


@functools.lru_cache(maxsize=None)
def _single_buffered_weights_supported():
    """One-time probe: does this jax accept pipeline_mode=pl.Buffered(1) on a
    pallas_call BlockSpec (single-buffered grid-resident operand)?"""
    if not hasattr(pl, "Buffered"):
        return False
    try:
        def _probe(w_ref, o_ref):
            o_ref[...] = w_ref[...] + 1.0

        f = pl.pallas_call(
            _probe,
            out_shape=jax.ShapeDtypeStruct((8, 128), jnp.float32),
            grid=(2,),
            in_specs=[pl.BlockSpec((8, 128), lambda i: (0, 0),
                                   pipeline_mode=pl.Buffered(1))],
            out_specs=pl.BlockSpec((8, 128), lambda i: (0, 0)),
        )
        jax.block_until_ready(f(jnp.zeros((8, 128), jnp.float32)))
        return True
    except Exception:                 # capability probe: fall back safely
        return False


def _gating_kernel(x_ref, y_ref, w_ref, bias_ref, g_ref, *, d):
    # x_ref, y_ref : [tm, d]    row tiles (d = lane-aligned feature dim)
    # w_ref        : [d, 6d]    packed [Wr_x|Wz_x | Wr_y|Wz_y|Wh_y | Wh_rx]
    # bias_ref     : [1, 2d]    f32; 0 on the r half, bg on the z half
    x = x_ref[...]
    y = y_ref[...]
    wdt = w_ref.dtype

    # Two wide shared-LHS MXU dots (f32 accumulation), slices on 128 bounds.
    a = jnp.dot(x.astype(wdt), w_ref[:, :2 * d],
                preferred_element_type=jnp.float32)            # [tm, 2d]
    b = jnp.dot(y.astype(wdt), w_ref[:, 2 * d:5 * d],
                preferred_element_type=jnp.float32)            # [tm, 3d]

    # One fused sigmoid over the lane-dense [tm, 2d] slab; bg folded in bias.
    u = jax.nn.sigmoid(a + b[:, :2 * d] - bias_ref[...])
    r = u[:, :d]
    z = u[:, d:]

    xf = x.astype(jnp.float32)
    rx = (r * xf).astype(wdt)
    h = jnp.tanh(jnp.dot(rx, w_ref[:, 5 * d:],
                         preferred_element_type=jnp.float32) + b[:, 2 * d:])

    g = xf + z * (h - xf)             # == (1 - z) * x + z * h
    g_ref[...] = g.astype(g_ref.dtype)


def pack_gating_params(wr, wz, wh, bg=0.1, *, matmul_dtype=None):
    """Host-side packing; call ONCE (e.g. at module init) and reuse.

    wr/wz/wh: nn.Linear(2D, D, bias=False) weights, shape [D, 2D].
    Returns (w_all [Dp, 6*Dp], bias_row [1, 2*Dp]) with Dp = round_up(D, 128).
    matmul_dtype=jnp.bfloat16 selects bf16 MXU operands (f32 accumulation),
    recommended on v6e/v7x when a small operand-rounding error is acceptable.
    """
    D = wr.shape[0]
    assert wr.shape == (D, 2 * D) and wz.shape == (D, 2 * D) and wh.shape == (D, 2 * D)
    Dp = D if D % 128 == 0 else _round_up(D, 128)
    pad = Dp - D

    def pad_block(w):                 # [D, D] -> [Dp, Dp]
        return jnp.pad(w, ((0, pad), (0, pad))) if pad else w

    wdt = jnp.dtype(matmul_dtype) if matmul_dtype is not None else wr.dtype
    wr_t, wz_t, wh_t = wr.T, wz.T, wh.T          # [2D, D]; rows :D act on x (y for Wh)
    w_all = jnp.concatenate(
        [pad_block(wr_t[:D]), pad_block(wz_t[:D]),                        # x-half
         pad_block(wr_t[D:]), pad_block(wz_t[D:]), pad_block(wh_t[:D]),   # y-half
         pad_block(wh_t[D:])],                                            # (r*x)-half
        axis=1).astype(wdt)

    bias_row = jnp.concatenate(
        [jnp.zeros((1, Dp), jnp.float32),
         jnp.ones((1, Dp), jnp.float32) * jnp.asarray(bg, jnp.float32)], axis=1)
    return w_all, bias_row


def gating_forward_packed(x, y, w_all, bias_row, *, tm=None):
    """x, y: [B, L, D]; (w_all, bias_row) from pack_gating_params."""
    B, L, D = x.shape
    N = B * L
    dt = x.dtype
    Dp = w_all.shape[0]
    assert w_all.shape == (Dp, 6 * Dp) and Dp % 128 == 0 and Dp >= D
    assert bias_row.shape == (1, 2 * Dp)

    # ---- inputs: flatten rows; lane-pad only when D is not 128-aligned -----
    x2 = x.reshape(N, D)
    y2 = y.reshape(N, D)
    lane_pad = Dp - D
    if lane_pad:
        x2 = jnp.pad(x2, ((0, 0), (0, lane_pad)))
        y2 = jnp.pad(y2, ((0, 0), (0, lane_pad)))

    # ---- row tile: large tiles, generation-aware VMEM budget, floor 128 ----
    single_buf = _single_buffered_weights_supported()
    w_bufs = 1 if single_buf else 2
    itemsize = jnp.dtype(dt).itemsize
    w_itemsize = jnp.dtype(w_all.dtype).itemsize

    def vmem_est(t):
        w_bytes = w_bufs * 6 * Dp * Dp * w_itemsize    # grid-resident weights
        io_bytes = 2 * 3 * t * Dp * itemsize           # x, y, g tiles (dbl-buffered)
        tmp_bytes = 9 * t * Dp * 4                     # f32 temporaries in flight
        return w_bytes + io_bytes + tmp_bytes

    budget = _vmem_budget_bytes()
    if tm is None:
        tm = 512
        while tm > 128 and vmem_est(tm) > budget:
            tm //= 2
    tm = min(tm, N)                   # single full-extent block for small N
    if tm < N and tm % 8:
        tm = max(8, (tm // 8) * 8)    # sublane alignment for partial grids

    grid = (pl.cdiv(N, tm),)          # ragged tail handled by block masking

    row_spec = pl.BlockSpec((tm, Dp), lambda i: (i, 0))
    w_kwargs = {"pipeline_mode": pl.Buffered(1)} if single_buf else {}
    w_spec = pl.BlockSpec((Dp, 6 * Dp), lambda i: (0, 0), **w_kwargs)
    bias_spec = pl.BlockSpec((1, 2 * Dp), lambda i: (0, 0))

    cp = {"dimension_semantics": ("parallel",)}
    est = vmem_est(tm)
    if est > 24 * 2**20:
        cp["vmem_limit_bytes"] = int(min(est + (8 << 20),
                                         (_tpu_vmem_capacity_bytes() * 9) // 10))

    out = pl.pallas_call(
        functools.partial(_gating_kernel, d=Dp),
        out_shape=jax.ShapeDtypeStruct((N, Dp), dt),
        grid=grid,
        in_specs=[row_spec, row_spec, w_spec, bias_spec],
        out_specs=row_spec,
        compiler_params=pltpu.CompilerParams(**cp),
    )(x2, y2, w_all, bias_row)

    if lane_pad:
        out = out[:, :D]
    return out.reshape(B, L, D)


def gating_forward(x, y, wr, wz, wh, *, bg=0.1, tm=None, matmul_dtype=None):
    """Convenience wrapper (packs per call).  In a real model pack once with
    pack_gating_params and call gating_forward_packed."""
    w_all, bias_row = pack_gating_params(wr, wz, wh, bg, matmul_dtype=matmul_dtype)
    return gating_forward_packed(x, y, w_all, bias_row, tm=tm)


def gating_reference(x, y, wr, wz, wh, bg=0.1):
    xy = jnp.concatenate([x, y], axis=-1)
    r = jax.nn.sigmoid(xy @ wr.T)
    z = jax.nn.sigmoid(xy @ wz.T - bg)
    h = jnp.tanh(jnp.concatenate([y, r * x], axis=-1) @ wh.T)
    return (1.0 - z) * x + z * h


if __name__ == "__main__":
    D = 32            # d_input
    bg = 0.1

    key = jax.random.PRNGKey(0)
    kx, ky, kr, kz, kh, kx2, ky2 = jax.random.split(key, 7)

    # nn.Linear(2D, D, bias=False): weight shape [D, 2D], uniform(+-1/sqrt(2D))
    bound = 1.0 / jnp.sqrt(2.0 * D)
    wr = jax.random.uniform(kr, (D, 2 * D), jnp.float32, -bound, bound)
    wz = jax.random.uniform(kz, (D, 2 * D), jnp.float32, -bound, bound)
    wh = jax.random.uniform(kh, (D, 2 * D), jnp.float32, -bound, bound)

    # Pack once (hoisted out of the per-call path), reuse across calls.
    w_all, bias_row = pack_gating_params(wr, wz, wh, bg)

    # Case 1: [B, L, D] = [2, 8, 32]; single full-extent row block.
    x = jax.random.normal(kx, (2, 8, D), dtype=jnp.float32)
    y = jax.random.normal(ky, (2, 8, D), dtype=jnp.float32)
    g = jax.block_until_ready(gating_forward_packed(x, y, w_all, bias_row))
    g_ref = gating_reference(x, y, wr, wz, wh, bg=bg)
    assert g.shape == x.shape
    assert jnp.allclose(g, g_ref, atol=1e-5, rtol=1e-5), "case 1 mismatch"

    # Case 2: ragged row count (N=15, tm=8) exercises the partial tail block.
    x2 = jax.random.normal(kx2, (3, 5, D), dtype=jnp.float32)
    y2 = jax.random.normal(ky2, (3, 5, D), dtype=jnp.float32)
    g2 = jax.block_until_ready(gating_forward_packed(x2, y2, w_all, bias_row, tm=8))
    g2_ref = gating_reference(x2, y2, wr, wz, wh, bg=bg)
    assert jnp.allclose(g2, g2_ref, atol=1e-5, rtol=1e-5), "case 2 mismatch"

    print("KERNEL_OK")
</pallas_src>

<mosaic_0001>
module attributes {stable_mosaic.version = 11 : i64} {
  func.func @_probe(%arg0: i32, %arg1: memref<8x128xf32, #tpu.memory_space<vmem>>, %arg2: memref<8x128xf32, #tpu.memory_space<vmem>>) attributes {dimension_semantics = [#tpu.dimension_semantics<arbitrary>], iteration_bounds = array<i64: 2>, scalar_prefetch = 0 : i64, scratch_operands = 0 : i64, tpu.core_type = #tpu.core_type<tc>, window_params = [{pipeline_mode = #tpu.pipeline_mode<synchronous>, transform_indices = @transform_0, window_bounds = array<i64: 8, 128>}, {pipeline_mode = #tpu.pipeline_mode<synchronous>, transform_indices = @transform_1, window_bounds = array<i64: 8, 128>}]} {
    %c0 = arith.constant 0 : index
    %c0_0 = arith.constant 0 : index
    %0 = vector.load %arg1[%c0, %c0_0] : memref<8x128xf32, #tpu.memory_space<vmem>>, vector<8x128xf32>
    %cst = arith.constant 1.000000e+00 : f32
    %1 = vector.broadcast %cst : f32 to vector<8x128xf32>
    %2 = arith.addf %0, %1 : vector<8x128xf32>
    %c0_1 = arith.constant 0 : index
    %c0_2 = arith.constant 0 : index
    %3 = vector.load %arg2[%c0_1, %c0_2] : memref<8x128xf32, #tpu.memory_space<vmem>>, vector<8x128xf32>
    tpu.vector_store %arg2[%c0_1, %c0_2], %2 {strides = array<i32>} : memref<8x128xf32, #tpu.memory_space<vmem>>, vector<8x128xf32>,
    return
  }
  func.func @transform_0(%arg0: i32) -> (i32, i32) {
    %c0_i32 = arith.constant 0 : i32
    %c0_i32_0 = arith.constant 0 : i32
    %c0_i32_1 = arith.constant 0 : i32
    return %c0_i32, %c0_i32_0 : i32, i32
  }
  func.func @transform_1(%arg0: i32) -> (i32, i32) {
    %c0_i32 = arith.constant 0 : i32
    %c0_i32_0 = arith.constant 0 : i32
    %c0_i32_1 = arith.constant 0 : i32
    return %c0_i32, %c0_i32_0 : i32, i32
  }
}

module attributes {stable_mosaic.version = 11 : i64} {
  func.func @_gating_kernel(%arg0: i32, %arg1: memref<16x128xf32, #tpu.memory_space<vmem>>, %arg2: memref<16x128xf32, #tpu.memory_space<vmem>>, %arg3: memref<128x768xf32, #tpu.memory_space<vmem>>, %arg4: memref<1x256xf32, #tpu.memory_space<vmem>>, %arg5: memref<16x128xf32, #tpu.memory_space<vmem>>) attributes {dimension_semantics = [#tpu.dimension_semantics<parallel>], iteration_bounds = array<i64: 1>, scalar_prefetch = 0 : i64, scratch_operands = 0 : i64, tpu.core_type = #tpu.core_type<tc>, window_params = [{transform_indices = @transform_0, window_bounds = array<i64: 16, 128>}, {transform_indices = @transform_1, window_bounds = array<i64: 16, 128>}, {pipeline_mode = #tpu.pipeline_mode<synchronous>, transform_indices = @transform_2, window_bounds = array<i64: 128, 768>}, {pipeline_mode = #tpu.pipeline_mode<synchronous>, transform_indices = @transform_3, window_bounds = array<i64: 1, 256>}, {transform_indices = @transform_4, window_bounds = array<i64: 16, 128>}]} {
    %c0 = arith.constant 0 : index
    %c0_0 = arith.constant 0 : index
    %0 = vector.load %arg1[%c0, %c0_0] : memref<16x128xf32, #tpu.memory_space<vmem>>, vector<16x128xf32>
    %c0_1 = arith.constant 0 : index
    %c0_2 = arith.constant 0 : index
    %1 = vector.load %arg2[%c0_1, %c0_2] : memref<16x128xf32, #tpu.memory_space<vmem>>, vector<16x128xf32>
    %c0_3 = arith.constant 0 : index
    %c0_4 = arith.constant 0 : index
    %2 = vector.load %arg3[%c0_3, %c0_4] : memref<128x768xf32, #tpu.memory_space<vmem>>, vector<128x256xf32>
    %cst = arith.constant dense<0.000000e+00> : vector<16x256xf32>
    %3 = tpu.matmul %0, %2, %cst {dimension_numbers = #tpu.dot_dimension_numbers<[1], [0], [0], [1], [0, 0, 1, 1], [], []>} : vector<16x128xf32>, vector<128x256xf32>, vector<16x256xf32> -> vector<16x256xf32>
    %c0_5 = arith.constant 0 : index
    %c256 = arith.constant 256 : index
    %4 = vector.load %arg3[%c0_5, %c256] : memref<128x768xf32, #tpu.memory_space<vmem>>, vector<128x384xf32>
    %cst_6 = arith.constant dense<0.000000e+00> : vector<16x384xf32>
    %5 = tpu.matmul %1, %4, %cst_6 {dimension_numbers = #tpu.dot_dimension_numbers<[1], [0], [0], [1], [0, 0, 1, 1], [], []>} : vector<16x128xf32>, vector<128x384xf32>, vector<16x384xf32> -> vector<16x384xf32>
    %6 = vector.extract_strided_slice %5 {offsets = [0, 0], sizes = [16, 256], strides = [1, 1]} : vector<16x384xf32> to vector<16x256xf32>
    %7 = arith.addf %3, %6 : vector<16x256xf32>
    %c0_7 = arith.constant 0 : index
    %c0_8 = arith.constant 0 : index
    %8 = vector.load %arg4[%c0_7, %c0_8] : memref<1x256xf32, #tpu.memory_space<vmem>>, vector<1x256xf32>
    %9 = vector.broadcast %8 : vector<1x256xf32> to vector<16x256xf32>
    %10 = arith.subf %7, %9 : vector<16x256xf32>
    %11 = arith.negf %10 : vector<16x256xf32>
    %12 = math.exp %11 : vector<16x256xf32>
    %cst_9 = arith.constant 1.000000e+00 : f32
    %13 = vector.broadcast %cst_9 : f32 to vector<16x256xf32>
    %14 = arith.addf %13, %12 : vector<16x256xf32>
    %15 = arith.divf %13, %14 : vector<16x256xf32>
    %16 = vector.extract_strided_slice %15 {offsets = [0, 0], sizes = [16, 128], strides = [1, 1]} : vector<16x256xf32> to vector<16x128xf32>
    %17 = vector.extract_strided_slice %15 {offsets = [0, 128], sizes = [16, 128], strides = [1, 1]} : vector<16x256xf32> to vector<16x128xf32>
    %18 = arith.mulf %16, %0 : vector<16x128xf32>
    %c0_10 = arith.constant 0 : index
    %c640 = arith.constant 640 : index
    %19 = vector.load %arg3[%c0_10, %c640] : memref<128x768xf32, #tpu.memory_space<vmem>>, vector<128x128xf32>
    %cst_11 = arith.constant dense<0.000000e+00> : vector<16x128xf32>
    %20 = tpu.matmul %18, %19, %cst_11 {dimension_numbers = #tpu.dot_dimension_numbers<[1], [0], [0], [1], [0, 0, 1, 1], [], []>} : vector<16x128xf32>, vector<128x128xf32>, vector<16x128xf32> -> vector<16x128xf32>
    %21 = vector.extract_strided_slice %5 {offsets = [0, 256], sizes = [16, 128], strides = [1, 1]} : vector<16x384xf32> to vector<16x128xf32>
    %22 = arith.addf %20, %21 : vector<16x128xf32>
    %23 = math.tanh %22 : vector<16x128xf32>
    %24 = arith.subf %23, %0 : vector<16x128xf32>
    %25 = arith.mulf %17, %24 : vector<16x128xf32>
    %26 = arith.addf %0, %25 : vector<16x128xf32>
    %c0_12 = arith.constant 0 : index
    %c0_13 = arith.constant 0 : index
    %27 = vector.load %arg5[%c0_12, %c0_13] : memref<16x128xf32, #tpu.memory_space<vmem>>, vector<16x128xf32>
    tpu.vector_store %arg5[%c0_12, %c0_13], %26 {strides = array<i32>} : memref<16x128xf32, #tpu.memory_space<vmem>>, vector<16x128xf32>,
    return
  }
  func.func @transform_0(%arg0: i32) -> (i32, i32) {
    %c0_i32 = arith.constant 0 : i32
    %c0_i32_0 = arith.constant 0 : i32
    return %arg0, %c0_i32 : i32, i32
  }
  func.func @transform_1(%arg0: i32) -> (i32, i32) {
    %c0_i32 = arith.constant 0 : i32
    %c0_i32_0 = arith.constant 0 : i32
    return %arg0, %c0_i32 : i32, i32
  }
  func.func @transform_2(%arg0: i32) -> (i32, i32) {
    %c0_i32 = arith.constant 0 : i32
    %c0_i32_0 = arith.constant 0 : i32
    %c0_i32_1 = arith.constant 0 : i32
    return %c0_i32, %c0_i32_0 : i32, i32
  }
  func.func @transform_3(%arg0: i32) -> (i32, i32) {
    %c0_i32 = arith.constant 0 : i32
    %c0_i32_0 = arith.constant 0 : i32
    %c0_i32_1 = arith.constant 0 : i32
    return %c0_i32, %c0_i32_0 : i32, i32
  }
  func.func @transform_4(%arg0: i32) -> (i32, i32) {
    %c0_i32 = arith.constant 0 : i32
    %c0_i32_0 = arith.constant 0 : i32
    return %arg0, %c0_i32 : i32, i32
  }
}

</mosaic_0001>

<llo_original>
// kernel: tpu_custom_call.1
$region0: #{tpu_custom_call.1}
  #allocation0 [shape = 'u32[]', space=smem, size = 0x4, offset = 0x4, fixed_abs, tag = 'smem constant byte address 0x4 - core index']
  #allocation1 [shape = 'u32[72,128]{1,0:T(1,128)}', space=vmem, size = 0x9000, scoped, tag = 'internal scratch']
  %s0 = inlined_call_operand.hbm [shape: f32[8,128], index: 0, kind: input, shape index: {}]
  %s1 = inlined_call_operand.hbm [shape: f32[8,128], index: 1, kind: output, shape index: {}]
  %s2 = sld [smem:[#allocation0]]
  $region41: #{tpu_custom_call.1} parent=0
    _
  %s4 = ssub.s32 1, %s2
  %s5 = scalar_select 0, %s4, %s2
  $region1: #{tpu_custom_call.1} parent=0
    #allocation2 [shape = 'u8[4096]{0}', space=vmem, size = 0x1000, scoped, tag = 'input window, operand 0, single buffered']
    #allocation3 [shape = 's32[2]{0}', space=sflag, size = 0x8, scoped, tag = 'scoped memory for tpu_custom_call.1']
    #allocation4 [shape = 's32[2]{0}', space=sflag, size = 0x8, scoped, tag = 'scoped memory for tpu_custom_call.1']
    #allocation5 [shape = 'u8[4096]{0}', space=vmem, size = 0x1000, scoped, tag = 'output window, operand 0, single buffered']
    %6 = vsyncpa [#allocation3], 0
    %7 = vsyncpa [#allocation4], 0
    loop: start=0, step=1, limit=4
    $region2: #{tpu_custom_call.1} parent=1 // loop_pre_header
      _
    $region3: #{tpu_custom_call.1} parent=1 // loop_header
      %s9 = sphi 0, %s13
      %p10 = scmp.ge.s32.totalorder %s9, 4
      %s17 = sphi 0, %s17
      %s19 = sphi 0, %s17
      %s20 = sphi 0, %s19
      %s34 = sphi 0, %s20
      %s38 = sphi 0, %s38
      %s40 = sphi 0, %s38
      %s41 = sphi 0, %s40
      %s55 = sphi 0, %s41
    $region4: #{tpu_custom_call.1} parent=1 // loop_header_branch
      %12 = sbr.rel (%p10) target = $region8
    $region5: #{tpu_custom_call.1} parent=1 // loop_body
      %s14 = ssub.s32 %s9, 1
      %s15 = ssub.s32 %s9, 2
      %s16 = sadd.s32 %s9, 1
      %s18 = sadd.s32 %s17, 1
      %p21 = scmp.eq.s32.totalorder %s9, 1
      %p22 = scmp.ne.s32.totalorder %s17, %s19
      %p23 = scmp.eq.s32.totalorder %s9, 0
      %p24 = por %p22, %p23
      %p25 = scmp.ne.s32.totalorder %s17, %s19
      %p26 = scmp.eq.s32.totalorder %s14, 1
      %p27 = por %p25, %p26
      %p28 = scmp.ne.s32.totalorder %s19, %s20
      %p29 = scmp.eq.s32.totalorder %s14, 0
      %p30 = por %p28, %p29
      %p31 = scmp.ne.s32.totalorder %s19, %s20
      %p32 = scmp.eq.s32.totalorder %s15, 1
      %p33 = por %p31, %p32
      %p35 = scmp.ne.s32.totalorder %s20, %s34
      %p36 = scmp.eq.s32.totalorder %s15, 0
      %p37 = por %p35, %p36
      %s39 = sadd.s32 %s38, 1
      %p42 = scmp.eq.s32.totalorder %s9, 1
      %p43 = scmp.ne.s32.totalorder %s38, %s40
      %p44 = scmp.eq.s32.totalorder %s9, 0
      %p45 = por %p43, %p44
      %p46 = scmp.ne.s32.totalorder %s38, %s40
      %p47 = scmp.eq.s32.totalorder %s14, 1
      %p48 = por %p46, %p47
      %p49 = scmp.ne.s32.totalorder %s40, %s41
      %p50 = scmp.eq.s32.totalorder %s14, 0
      %p51 = por %p49, %p50
      %p52 = scmp.ne.s32.totalorder %s40, %s41
      %p53 = scmp.eq.s32.totalorder %s15, 1
      %p54 = por %p52, %p53
      %p56 = scmp.ne.s32.totalorder %s41, %s55
      %p57 = scmp.eq.s32.totalorder %s15, 0
      %p58 = por %p56, %p57
      %p59 = scmp.le.s32.totalorder 1, %s9
      %p60 = scmp.lt.s32.totalorder %s9, 3
      %p61 = pnand %p59, %p60
      %p62 = pneg %p61
      // Predicated region
      $region9: #{tpu_custom_call.1} parent=5 // pred_check
        _
      $region10: #{tpu_custom_call.1} parent=5 // pred_check_branch
        %64 = sbr.rel (%p61) target = $region12
      $region11: #{tpu_custom_call.1} parent=5 // pred_region
        %s65 = ssub.s32 %s9, 1
        // Predicated region
        $region13: #{tpu_custom_call.1} parent=11 // pred_check
          %p66 = pneg %p30
        $region14: #{tpu_custom_call.1} parent=11 // pred_check_branch
          %68 = sbr.rel (%p66) target = $region16
        $region15: #{tpu_custom_call.1} parent=11 // pred_region
          %70 = vsyncadd [#allocation3], 0
          %s72 = sshll.u32 %s0, 4
          %s73 = int_to_ptr.hbm [resolvable:$true] %s72
          %s74 = sshll.u32 [#allocation2], 4
          %s75 = int_to_ptr.vmem [resolvable:$true] %s74
          %77 = dma.hbm_to_vmem [thread:$0]  %s73, 128, %s75, [#allocation3]
        $region16: #{tpu_custom_call.1} parent=11 // pred_fallthru
          _
      $region12: #{tpu_custom_call.1} parent=5 // pred_fallthru
        _
      %p78 = scmp.lt.s32.totalorder %s9, 2
      // Predicated region
      $region17: #{tpu_custom_call.1} parent=5 // pred_check
        %p79 = pneg %p78
      $region18: #{tpu_custom_call.1} parent=5 // pred_check_branch
        %81 = sbr.rel (%p79) target = $region20
      $region19: #{tpu_custom_call.1} parent=5 // pred_region
        _
      $region20: #{tpu_custom_call.1} parent=5 // pred_fallthru
        _
      %p82 = scmp.le.s32.totalorder 1, %s9
      %p83 = scmp.lt.s32.totalorder %s9, 3
      %p84 = pnand %p82, %p83
      %p85 = pneg %p84
      // Predicated region
      $region21: #{tpu_custom_call.1} parent=5 // pred_check
        _
      $region22: #{tpu_custom_call.1} parent=5 // pred_check_branch
        %87 = sbr.rel (%p84) target = $region24
      $region23: #{tpu_custom_call.1} parent=5 // pred_region
        %s88 = ssub.s32 %s9, 1
        // Predicated region
        $region25: #{tpu_custom_call.1} parent=23 // pred_check
          %p89 = pneg %p30
        $region26: #{tpu_custom_call.1} parent=23 // pred_check_branch
          %91 = sbr.rel (%p89) target = $region28
        $region27: #{tpu_custom_call.1} parent=23 // pred_region
          %93 = dma.done [#allocation3], 128
        $region28: #{tpu_custom_call.1} parent=23 // pred_fallthru
          _
        %p94 = pneg %p30
        %p95 = pneg %p27
        %p96 = pneg %p51
        %p97 = pneg %p48
        %v98 = vld [vmem:[#allocation2] sm:$0xff]
        %v99 = vadd.f32 %v98, 1.0
        %100 = vst [vmem:[#allocation5] sm:$0xff] %v99
        // Predicated region
        $region29: #{tpu_custom_call.1} parent=23 // pred_check
          %p101 = pneg %p48
        $region30: #{tpu_custom_call.1} parent=23 // pred_check_branch
          %103 = sbr.rel (%p101) target = $region32
        $region31: #{tpu_custom_call.1} parent=23 // pred_region
          %105 = vsyncadd [#allocation4], 0
          %s107 = sshll.u32 [#allocation5], 4
          %s108 = int_to_ptr.vmem [resolvable:$true] %s107
          %s109 = sshll.u32 %s1, 4
          %s110 = int_to_ptr.hbm [resolvable:$true] %s109
          %112 = dma.vmem_to_hbm [thread:$0]  %s108, 128, %s110, [#allocation4]
        $region32: #{tpu_custom_call.1} parent=23 // pred_fallthru
          _
        // Predicated region
        $region33: #{tpu_custom_call.1} parent=23 // pred_check
          %p113 = pneg %p48
        $region34: #{tpu_custom_call.1} parent=23 // pred_check_branch
          %115 = sbr.rel (%p113) target = $region36
        $region35: #{tpu_custom_call.1} parent=23 // pred_region
          %117 = dma.done [#allocation4], 128
        $region36: #{tpu_custom_call.1} parent=23 // pred_fallthru
          _
      $region24: #{tpu_custom_call.1} parent=5 // pred_fallthru
        _
      %p118 = scmp.le.s32.totalorder 2, %s9
      // Predicated region
      $region37: #{tpu_custom_call.1} parent=5 // pred_check
        %p119 = pneg %p118
      $region38: #{tpu_custom_call.1} parent=5 // pred_check_branch
        %121 = sbr.rel (%p119) target = $region40
      $region39: #{tpu_custom_call.1} parent=5 // pred_region
        %s122 = ssub.s32 %s9, 2
      $region40: #{tpu_custom_call.1} parent=5 // pred_fallthru
        _
    $region6: #{tpu_custom_call.1} parent=1 // loop_footer
      %s13 = sadd.s32 1, %s9
    $region7: #{tpu_custom_call.1} parent=1 // loop_footer_branch
      %8 = sbr.rel target = $region3
    $region8: #{tpu_custom_call.1} parent=1 // loop_exit
      _
    %123 = vsyncpa [#allocation3], 1
    %s124 = scalar_lea.sflag [#allocation3], 1
    %125 = vsyncpa %s124, 1
    %126 = vsyncpa [#allocation4], 1
    %s127 = scalar_lea.sflag [#allocation4], 1
    %128 = vsyncpa %s127, 1

// kernel: tpu_custom_call.1
$region0: #{tpu_custom_call.1}
  #allocation0 [shape = 'u32[]', space=smem, size = 0x4, offset = 0x4, fixed_abs, tag = 'smem constant byte address 0x4 - core index']
  #allocation1 [shape = 'u32[72,128]{1,0:T(1,128)}', space=vmem, size = 0x9000, scoped, tag = 'internal scratch']
  %s0 = inlined_call_operand.hbm [shape: f32[16,128], index: 0, kind: input, shape index: {}]
  %s1 = inlined_call_operand.hbm [shape: f32[16,128], index: 1, kind: input, shape index: {}]
  %s2 = inlined_call_operand.hbm [shape: f32[128,768], index: 2, kind: input, shape index: {}]
  %s3 = inlined_call_operand.vmem [shape: f32[1,256], index: 3, kind: input, shape index: {}]
  %s4 = inlined_call_operand.hbm [shape: f32[16,128], index: 4, kind: output, shape index: {}]
  %s5 = sld [smem:[#allocation0]]
  $region38: #{tpu_custom_call.1} parent=0
    _
  %s7 = ssub.s32 1, %s5
  %s8 = scalar_select 0, %s7, %s5
  $region1: #{tpu_custom_call.1} parent=0
    #allocation2 [shape = 'u8[8192]{0}', space=vmem, size = 0x2000, scoped, tag = 'input window, operand 0, single buffered']
    #allocation3 [shape = 's32[1]{0}', space=sflag, size = 0x4, scoped, tag = 'scoped memory for tpu_custom_call.1']
    #allocation4 [shape = 's32[1]{0}', space=sflag, size = 0x4, scoped, tag = 'scoped memory for tpu_custom_call.1']
    #allocation5 [shape = 'u8[8192]{0}', space=vmem, size = 0x2000, scoped, tag = 'input window, operand 1, single buffered']
    #allocation6 [shape = 's32[1]{0}', space=sflag, size = 0x4, scoped, tag = 'scoped memory for tpu_custom_call.1']
    #allocation7 [shape = 'u8[393216]{0}', space=vmem, size = 0x60000, scoped, tag = 'input window, operand 2, single buffered']
    #allocation8 [shape = 'u8[8192]{0}', space=vmem, size = 0x2000, scoped, tag = 'output window, operand 0, single buffered']
    %9 = vsyncpa [#allocation3], 0
    %10 = vsyncpa [#allocation6], 0
    %11 = vsyncpa [#allocation4], 0
    // Predicated region
    $region2: #{tpu_custom_call.1} parent=1 // pred_check
      _
    $region3: #{tpu_custom_call.1} parent=1 // pred_check_branch
      %13 = sbr.rel (0) target = $region5
    $region4: #{tpu_custom_call.1} parent=1 // pred_region
      %15 = vsyncadd [#allocation3], 0
      %s16 = sshll.u32 %s0, 4
      %s17 = int_to_ptr.hbm [resolvable:$true] %s16
      %s18 = sshll.u32 [#allocation2], 4
      %s19 = int_to_ptr.vmem [resolvable:$true] %s18
      %24 = dma.hbm_to_vmem [thread:$0]  %s17, 256, %s19, [#allocation3], 128, 128, 8
    $region5: #{tpu_custom_call.1} parent=1 // pred_fallthru
      _
    // Predicated region
    $region6: #{tpu_custom_call.1} parent=1 // pred_check
      _
    $region7: #{tpu_custom_call.1} parent=1 // pred_check_branch
      %26 = sbr.rel (0) target = $region9
    $region8: #{tpu_custom_call.1} parent=1 // pred_region
      %28 = vsyncadd [#allocation6], 0
      %s29 = sshll.u32 %s1, 4
      %s30 = int_to_ptr.hbm [resolvable:$true] %s29
      %s31 = sshll.u32 [#allocation5], 4
      %s32 = int_to_ptr.vmem [resolvable:$true] %s31
      %37 = dma.hbm_to_vmem [thread:$0]  %s30, 256, %s32, [#allocation6], 128, 128, 8
    $region9: #{tpu_custom_call.1} parent=1 // pred_fallthru
      _
    // Predicated region
    $region10: #{tpu_custom_call.1} parent=1 // pred_check
      _
    $region11: #{tpu_custom_call.1} parent=1 // pred_check_branch
      %39 = sbr.rel (0) target = $region13
    $region12: #{tpu_custom_call.1} parent=1 // pred_region
      %41 = vsyncadd [#allocation6], 0
      %s42 = sshll.u32 %s2, 4
      %s43 = int_to_ptr.hbm [resolvable:$true] %s42
      %s44 = sshll.u32 [#allocation7], 4
      %s45 = int_to_ptr.vmem [resolvable:$true] %s44
      %50 = dma.hbm_to_vmem [thread:$0]  %s43, 12288, %s45, [#allocation6], 768, 768, 48
    $region13: #{tpu_custom_call.1} parent=1 // pred_fallthru
      _
    // Predicated region
    $region14: #{tpu_custom_call.1} parent=1 // pred_check
      _
    $region15: #{tpu_custom_call.1} parent=1 // pred_check_branch
      %52 = sbr.rel (0) target = $region17
    $region16: #{tpu_custom_call.1} parent=1 // pred_region
      _
    $region17: #{tpu_custom_call.1} parent=1 // pred_fallthru
      _
    // Predicated region
    $region18: #{tpu_custom_call.1} parent=1 // pred_check
      _
    $region19: #{tpu_custom_call.1} parent=1 // pred_check_branch
      %54 = sbr.rel (0) target = $region21
    $region20: #{tpu_custom_call.1} parent=1 // pred_region
      %56 = dma.done [#allocation3], 256
    $region21: #{tpu_custom_call.1} parent=1 // pred_fallthru
      _
    // Predicated region
    $region22: #{tpu_custom_call.1} parent=1 // pred_check
      _
    $region23: #{tpu_custom_call.1} parent=1 // pred_check_branch
      %58 = sbr.rel (0) target = $region25
    $region24: #{tpu_custom_call.1} parent=1 // pred_region
      %60 = dma.done [#allocation6], 256
    $region25: #{tpu_custom_call.1} parent=1 // pred_fallthru
      _
    // Predicated region
    $region26: #{tpu_custom_call.1} parent=1 // pred_check
      _
    $region27: #{tpu_custom_call.1} parent=1 // pred_check_branch
      %62 = sbr.rel (0) target = $region29
    $region28: #{tpu_custom_call.1} parent=1 // pred_region
      %64 = dma.done [#allocation6], 12288
    $region29: #{tpu_custom_call.1} parent=1 // pred_fallthru
      _
    %v65 = vld [vmem:[#allocation2] sm:$0xff]
    %v66 = vld [vmem:[#allocation2 + $0x8] sm:$0xff]
    %v67 = vld [vmem:[#allocation5] sm:$0xff]
    %v68 = vld [vmem:[#allocation5 + $0x8] sm:$0xff]
    %v69 = vld [vmem:[#allocation7] sm:$0xff]
    %v70 = vld [vmem:[#allocation7 + $0x8] sm:$0xff]
    %v71 = vld [vmem:[#allocation7 + $0x30] sm:$0xff]
    %v72 = vld [vmem:[#allocation7 + $0x38] sm:$0xff]
    %v73 = vld [vmem:[#allocation7 + $0x60] sm:$0xff]
    %v74 = vld [vmem:[#allocation7 + $0x68] sm:$0xff]
    %v75 = vld [vmem:[#allocation7 + $0x90] sm:$0xff]
    %v76 = vld [vmem:[#allocation7 + $0x98] sm:$0xff]
    %v77 = vld [vmem:[#allocation7 + $0xc0] sm:$0xff]
    %v78 = vld [vmem:[#allocation7 + $0xc8] sm:$0xff]
    %v79 = vld [vmem:[#allocation7 + $0xf0] sm:$0xff]
    %v80 = vld [vmem:[#allocation7 + $0xf8] sm:$0xff]
    %v81 = vld [vmem:[#allocation7 + $0x120] sm:$0xff]
    %v82 = vld [vmem:[#allocation7 + $0x128] sm:$0xff]
    %v83 = vld [vmem:[#allocation7 + $0x150] sm:$0xff]
    %v84 = vld [vmem:[#allocation7 + $0x158] sm:$0xff]
    %v85 = vld [vmem:[#allocation7 + $0x180] sm:$0xff]
    %v86 = vld [vmem:[#allocation7 + $0x188] sm:$0xff]
    %v87 = vld [vmem:[#allocation7 + $0x1b0] sm:$0xff]
    %v88 = vld [vmem:[#allocation7 + $0x1b8] sm:$0xff]
    %v89 = vld [vmem:[#allocation7 + $0x1e0] sm:$0xff]
    %v90 = vld [vmem:[#allocation7 + $0x1e8] sm:$0xff]
    %v91 = vld [vmem:[#allocation7 + $0x210] sm:$0xff]
    %v92 = vld [vmem:[#allocation7 + $0x218] sm:$0xff]
    %v93 = vld [vmem:[#allocation7 + $0x240] sm:$0xff]
    %v94 = vld [vmem:[#allocation7 + $0x248] sm:$0xff]
    %v95 = vld [vmem:[#allocation7 + $0x270] sm:$0xff]
    %v96 = vld [vmem:[#allocation7 + $0x278] sm:$0xff]
    %v97 = vld [vmem:[#allocation7 + $0x2a0] sm:$0xff]
    %v98 = vld [vmem:[#allocation7 + $0x2a8] sm:$0xff]
    %v99 = vld [vmem:[#allocation7 + $0x2d0] sm:$0xff]
    %v100 = vld [vmem:[#allocation7 + $0x2d8] sm:$0xff]
    %v101 = vld [vmem:[#allocation7 + $0x10] sm:$0xff]
    %v102 = vld [vmem:[#allocation7 + $0x18] sm:$0xff]
    %v103 = vld [vmem:[#allocation7 + $0x20] sm:$0xff]
    %v104 = vld [vmem:[#allocation7 + $0x40] sm:$0xff]
    %v105 = vld [vmem:[#allocation7 + $0x48] sm:$0xff]
    %v106 = vld [vmem:[#allocation7 + $0x50] sm:$0xff]
    %v107 = vld [vmem:[#allocation7 + $0x70] sm:$0xff]
    %v108 = vld [vmem:[#allocation7 + $0x78] sm:$0xff]
    %v109 = vld [vmem:[#allocation7 + $0x80] sm:$0xff]
    %v110 = vld [vmem:[#allocation7 + $0xa0] sm:$0xff]
    %v111 = vld [vmem:[#allocation7 + $0xa8] sm:$0xff]
    %v112 = vld [vmem:[#allocation7 + $0xb0] sm:$0xff]
    %v113 = vld [vmem:[#allocation7 + $0xd0] sm:$0xff]
    %v114 = vld [vmem:[#allocation7 + $0xd8] sm:$0xff]
    %v115 = vld [vmem:[#allocation7 + $0xe0] sm:$0xff]
    %v116 = vld [vmem:[#allocation7 + $0x100] sm:$0xff]
    %v117 = vld [vmem:[#allocation7 + $0x108] sm:$0xff]
    %v118 = vld [vmem:[#allocation7 + $0x110] sm:$0xff]
    %v119 = vld [vmem:[#allocation7 + $0x130] sm:$0xff]
    %v120 = vld [vmem:[#allocation7 + $0x138] sm:$0xff]
    %v121 = vld [vmem:[#allocation7 + $0x140] sm:$0xff]
    %v122 = vld [vmem:[#allocation7 + $0x160] sm:$0xff]
    %v123 = vld [vmem:[#allocation7 + $0x168] sm:$0xff]
    %v124 = vld [vmem:[#allocation7 + $0x170] sm:$0xff]
    %v125 = vld [vmem:[#allocation7 + $0x190] sm:$0xff]
    %v126 = vld [vmem:[#allocation7 + $0x198] sm:$0xff]
    %v127 = vld [vmem:[#allocation7 + $0x1a0] sm:$0xff]
    %v128 = vld [vmem:[#allocation7 + $0x1c0] sm:$0xff]
    %v129 = vld [vmem:[#allocation7 + $0x1c8] sm:$0xff]
    %v130 = vld [vmem:[#allocation7 + $0x1d0] sm:$0xff]
    %v131 = vld [vmem:[#allocation7 + $0x1f0] sm:$0xff]
    %v132 = vld [vmem:[#allocation7 + $0x1f8] sm:$0xff]
    %v133 = vld [vmem:[#allocation7 + $0x200] sm:$0xff]
    %v134 = vld [vmem:[#allocation7 + $0x220] sm:$0xff]
    %v135 = vld [vmem:[#allocation7 + $0x228] sm:$0xff]
    %v136 = vld [vmem:[#allocation7 + $0x230] sm:$0xff]
    %v137 = vld [vmem:[#allocation7 + $0x250] sm:$0xff]
    %v138 = vld [vmem:[#allocation7 + $0x258] sm:$0xff]
    %v139 = vld [vmem:[#allocation7 + $0x260] sm:$0xff]
    %v140 = vld [vmem:[#allocation7 + $0x280] sm:$0xff]
    %v141 = vld [vmem:[#allocation7 + $0x288] sm:$0xff]
    %v142 = vld [vmem:[#allocation7 + $0x290] sm:$0xff]
    %v143 = vld [vmem:[#allocation7 + $0x2b0] sm:$0xff]
    %v144 = vld [vmem:[#allocation7 + $0x2b8] sm:$0xff]
    %v145 = vld [vmem:[#allocation7 + $0x2c0] sm:$0xff]
    %v146 = vld [vmem:[#allocation7 + $0x2e0] sm:$0xff]
    %v147 = vld [vmem:[#allocation7 + $0x2e8] sm:$0xff]
    %v148 = vld [vmem:[#allocation7 + $0x2f0] sm:$0xff]
    %149 = vmatpush.msra.mxu0 %v146
    %150 = vmatpush.msra.mxu0 %v143
    %151 = vmatpush.msra.mxu0 %v140
    %152 = vmatpush.msra.mxu0 %v137
    %153 = vmatpush.msra.mxu0 %v134
    %154 = vmatpush.msra.mxu0 %v131
    %155 = vmatpush.msra.mxu0 %v128
    %156 = vmatpush.msra.mxu0 %v125
    %157 = vmatpush.msra.mxu0 %v122
    %158 = vmatpush.msra.mxu0 %v119
    %159 = vmatpush.msra.mxu0 %v116
    %160 = vmatpush.msra.mxu0 %v113
    %161 = vmatpush.msra.mxu0 %v110
    %162 = vmatpush.msra.mxu0 %v107
    %163 = vmatpush.msra.mxu0 %v104
    %164 = vmatpush.msra.mxu0 %v101
    %165 = vmatmul.f32.gmra.mxu0 %v67
    %v166 = vpop.f32.mrf.mxu0
    %v167 = vadd.f32 0.0, %v166
    %168 = vmatmul.f32.gmra.mxu0 %v68
    %v169 = vpop.f32.mrf.mxu0
    %v170 = vadd.f32 0.0, %v169
    %171 = vdwg.mxu0
    %172 = vmatpush.msra.mxu0 %v147
    %173 = vmatpush.msra.mxu0 %v144
    %174 = vmatpush.msra.mxu0 %v141
    %175 = vmatpush.msra.mxu0 %v138
    %176 = vmatpush.msra.mxu0 %v135
    %177 = vmatpush.msra.mxu0 %v132
    %178 = vmatpush.msra.mxu0 %v129
    %179 = vmatpush.msra.mxu0 %v126
    %180 = vmatpush.msra.mxu0 %v123
    %181 = vmatpush.msra.mxu0 %v120
    %182 = vmatpush.msra.mxu0 %v117
    %183 = vmatpush.msra.mxu0 %v114
    %184 = vmatpush.msra.mxu0 %v111
    %185 = vmatpush.msra.mxu0 %v108
    %186 = vmatpush.msra.mxu0 %v105
    %187 = vmatpush.msra.mxu0 %v102
    %188 = vmatmul.f32.gmra.mxu0 %v67
    %v189 = vpop.f32.mrf.mxu0
    %v190 = vadd.f32 0.0, %v189
    %191 = vmatmul.f32.gmra.mxu0 %v68
    %v192 = vpop.f32.mrf.mxu0
    %v193 = vadd.f32 0.0, %v192
    %194 = vdwg.mxu0
    %195 = vmatpush.msra.mxu0 %v148
    %196 = vmatpush.msra.mxu0 %v145
    %197 = vmatpush.msra.mxu0 %v142
    %198 = vmatpush.msra.mxu0 %v139
    %199 = vmatpush.msra.mxu0 %v136
    %200 = vmatpush.msra.mxu0 %v133
    %201 = vmatpush.msra.mxu0 %v130
    %202 = vmatpush.msra.mxu0 %v127
    %203 = vmatpush.msra.mxu0 %v124
    %204 = vmatpush.msra.mxu0 %v121
    %205 = vmatpush.msra.mxu0 %v118
    %206 = vmatpush.msra.mxu0 %v115
    %207 = vmatpush.msra.mxu0 %v112
    %208 = vmatpush.msra.mxu0 %v109
    %209 = vmatpush.msra.mxu0 %v106
    %210 = vmatpush.msra.mxu0 %v103
    %211 = vmatmul.f32.gmra.mxu0 %v67
    %v212 = vpop.f32.mrf.mxu0
    %v213 = vadd.f32 0.0, %v212
    %214 = vmatmul.f32.gmra.mxu0 %v68
    %v215 = vpop.f32.mrf.mxu0
    %v216 = vadd.f32 0.0, %v215
    %217 = vdwg.mxu0
    %218 = vmatpush.msra.mxu0 %v99
    %219 = vmatpush.msra.mxu0 %v97
    %220 = vmatpush.msra.mxu0 %v95
    %221 = vmatpush.msra.mxu0 %v93
    %222 = vmatpush.msra.mxu0 %v91
    %223 = vmatpush.msra.mxu0 %v89
    %224 = vmatpush.msra.mxu0 %v87
    %225 = vmatpush.msra.mxu0 %v85
    %226 = vmatpush.msra.mxu0 %v83
    %227 = vmatpush.msra.mxu0 %v81
    %228 = vmatpush.msra.mxu0 %v79
    %229 = vmatpush.msra.mxu0 %v77
    %230 = vmatpush.msra.mxu0 %v75
    %231 = vmatpush.msra.mxu0 %v73
    %232 = vmatpush.msra.mxu0 %v71
    %233 = vmatpush.msra.mxu0 %v69
    %234 = vmatmul.f32.gmra.mxu0 %v65
    %v235 = vpop.f32.mrf.mxu0
    %v236 = vadd.f32 %v167, %v235
    %237 = vmatmul.f32.gmra.mxu0 %v66
    %v238 = vpop.f32.mrf.mxu0
    %v239 = vadd.f32 %v170, %v238
    %240 = vdwg.mxu0
    %241 = vmatpush.msra.mxu0 %v100
    %242 = vmatpush.msra.mxu0 %v98
    %243 = vmatpush.msra.mxu0 %v96
    %244 = vmatpush.msra.mxu0 %v94
    %245 = vmatpush.msra.mxu0 %v92
    %246 = vmatpush.msra.mxu0 %v90
    %247 = vmatpush.msra.mxu0 %v88
    %248 = vmatpush.msra.mxu0 %v86
    %249 = vmatpush.msra.mxu0 %v84
    %250 = vmatpush.msra.mxu0 %v82
    %251 = vmatpush.msra.mxu0 %v80
    %252 = vmatpush.msra.mxu0 %v78
    %253 = vmatpush.msra.mxu0 %v76
    %254 = vmatpush.msra.mxu0 %v74
    %255 = vmatpush.msra.mxu0 %v72
    %256 = vmatpush.msra.mxu0 %v70
    %257 = vmatmul.f32.gmra.mxu0 %v65
    %v258 = vpop.f32.mrf.mxu0
    %v259 = vadd.f32 %v190, %v258
    %260 = vmatmul.f32.gmra.mxu0 %v66
    %v261 = vpop.f32.mrf.mxu0
    %v262 = vadd.f32 %v193, %v261
    %263 = vdwg.mxu0
    %v264 = vld [vmem:[%s3] sm:$0x3]
    %v266 = vperm.slane %v264, 0
    %v267 = vperm.slane %v264, 1
    %v270 = vsub.f32 %v236, %v266
    %v271 = vsub.f32 %v259, %v267
    %v272 = vsub.f32 %v239, %v266
    %v273 = vsub.f32 %v262, %v267
    %v274 = vxor.u32 %v270, 2147483648
    %v275 = vxor.u32 %v271, 2147483648
    %v276 = vxor.u32 %v272, 2147483648
    %v277 = vxor.u32 %v273, 2147483648
    %v278 = vmul.f32 %v274, 1.442695
    %v279 = vpow.pop %v278
    %v280 = vmul.f32 %v275, 1.442695
    %v281 = vpow.pop %v280
    %v282 = vmul.f32 %v276, 1.442695
    %v283 = vpow.pop %v282
    %v284 = vmul.f32 %v277, 1.442695
    %v285 = vpow.pop %v284
    %v286 = vadd.f32 %v279, 1.0
    %v287 = vadd.f32 %v281, 1.0
    %v288 = vadd.f32 %v283, 1.0
    %v289 = vadd.f32 %v285, 1.0
    %v290 = vrcp.pop %v286
    %v291 = vmul.f32 %v286, %v290
    %v292 = vsub.f32 1.0, %v291
    %v293 = vmul.f32 %v290, %v292
    %v294 = vadd.f32 %v290, %v293
    %vm295 = vweird.f32 %v286
    %vm296 = vweird.f32 %v290
    %vm297 = vmor %vm295, %vm296
    %v298 = vsel %vm297, %v290, %v294
    %v299 = vand.u32 2147483647, %v286
    %vm300 = vcmp.eq.f32.partialorder %v299, 8.507059e+37
    %v301 = vand.u32 %v286, 2147483648
    %v302 = vor.u32 1.1754944e-38, %v301
    %v303 = vsel %vm300, %v302, %v298
    %v304 = vmul.f32 1.0, %v303
    %v305 = vrcp.pop %v287
    %v306 = vmul.f32 %v287, %v305
    %v307 = vsub.f32 1.0, %v306
    %v308 = vmul.f32 %v305, %v307
    %v309 = vadd.f32 %v305, %v308
    %vm310 = vweird.f32 %v287
    %vm311 = vweird.f32 %v305
    %vm312 = vmor %vm310, %vm311
    %v313 = vsel %vm312, %v305, %v309
    %v314 = vand.u32 2147483647, %v287
    %vm315 = vcmp.eq.f32.partialorder %v314, 8.507059e+37
    %v316 = vand.u32 %v287, 2147483648
    %v317 = vor.u32 1.1754944e-38, %v316
    %v318 = vsel %vm315, %v317, %v313
    %v319 = vmul.f32 1.0, %v318
    %v320 = vrcp.pop %v288
    %v321 = vmul.f32 %v288, %v320
    %v322 = vsub.f32 1.0, %v321
    %v323 = vmul.f32 %v320, %v322
    %v324 = vadd.f32 %v320, %v323
    %vm325 = vweird.f32 %v288
    %vm326 = vweird.f32 %v320
    %vm327 = vmor %vm325, %vm326
    %v328 = vsel %vm327, %v320, %v324
    %v329 = vand.u32 2147483647, %v288
    %vm330 = vcmp.eq.f32.partialorder %v329, 8.507059e+37
    %v331 = vand.u32 %v288, 2147483648
    %v332 = vor.u32 1.1754944e-38, %v331
    %v333 = vsel %vm330, %v332, %v328
    %v334 = vmul.f32 1.0, %v333
    %v335 = vrcp.pop %v289
    %v336 = vmul.f32 %v289, %v335
    %v337 = vsub.f32 1.0, %v336
    %v338 = vmul.f32 %v335, %v337
    %v339 = vadd.f32 %v335, %v338
    %vm340 = vweird.f32 %v289
    %vm341 = vweird.f32 %v335
    %vm342 = vmor %vm340, %vm341
    %v343 = vsel %vm342, %v335, %v339
    %v344 = vand.u32 2147483647, %v289
    %vm345 = vcmp.eq.f32.partialorder %v344, 8.507059e+37
    %v346 = vand.u32 %v289, 2147483648
    %v347 = vor.u32 1.1754944e-38, %v346
    %v348 = vsel %vm345, %v347, %v343
    %v349 = vmul.f32 1.0, %v348
    %v350 = vmul.f32 %v304, %v65
    %v351 = vmul.f32 %v334, %v66
    %v352 = vld [vmem:[#allocation7 + $0x28] sm:$0xff]
    %v353 = vld [vmem:[#allocation7 + $0x58] sm:$0xff]
    %v354 = vld [vmem:[#allocation7 + $0x88] sm:$0xff]
    %v355 = vld [vmem:[#allocation7 + $0xb8] sm:$0xff]
    %v356 = vld [vmem:[#allocation7 + $0xe8] sm:$0xff]
    %v357 = vld [vmem:[#allocation7 + $0x118] sm:$0xff]
    %v358 = vld [vmem:[#allocation7 + $0x148] sm:$0xff]
    %v359 = vld [vmem:[#allocation7 + $0x178] sm:$0xff]
    %v360 = vld [vmem:[#allocation7 + $0x1a8] sm:$0xff]
    %v361 = vld [vmem:[#allocation7 + $0x1d8] sm:$0xff]
    %v362 = vld [vmem:[#allocation7 + $0x208] sm:$0xff]
    %v363 = vld [vmem:[#allocation7 + $0x238] sm:$0xff]
    %v364 = vld [vmem:[#allocation7 + $0x268] sm:$0xff]
    %v365 = vld [vmem:[#allocation7 + $0x298] sm:$0xff]
    %v366 = vld [vmem:[#allocation7 + $0x2c8] sm:$0xff]
    %v367 = vld [vmem:[#allocation7 + $0x2f8] sm:$0xff]
    %368 = vmatpush.msra.mxu0 %v367
    %369 = vmatpush.msra.mxu0 %v366
    %370 = vmatpush.msra.mxu0 %v365
    %371 = vmatpush.msra.mxu0 %v364
    %372 = vmatpush.msra.mxu0 %v363
    %373 = vmatpush.msra.mxu0 %v362
    %374 = vmatpush.msra.mxu0 %v361
    %375 = vmatpush.msra.mxu0 %v360
    %376 = vmatpush.msra.mxu0 %v359
    %377 = vmatpush.msra.mxu0 %v358
    %378 = vmatpush.msra.mxu0 %v357
    %379 = vmatpush.msra.mxu0 %v356
    %380 = vmatpush.msra.mxu0 %v355
    %381 = vmatpush.msra.mxu0 %v354
    %382 = vmatpush.msra.mxu0 %v353
    %383 = vmatpush.msra.mxu0 %v352
    %384 = vmatmul.f32.gmra.mxu0 %v350
    %v385 = vpop.f32.mrf.mxu0
    %v386 = vadd.f32 %v213, %v385
    %387 = vmatmul.f32.gmra.mxu0 %v351
    %v388 = vpop.f32.mrf.mxu0
    %v389 = vadd.f32 %v216, %v388
    %390 = vdwg.mxu0
    %v391 = vtanh.pop %v386
    %v392 = vtanh.pop %v389
    %v393 = vsub.f32 %v391, %v65
    %v394 = vsub.f32 %v392, %v66
    %v395 = vmul.f32 %v319, %v393
    %v396 = vmul.f32 %v349, %v394
    %v397 = vadd.f32 %v65, %v395
    %v398 = vadd.f32 %v66, %v396
    %399 = vst [vmem:[#allocation8] sm:$0xff] %v397
    %400 = vst [vmem:[#allocation8 + $0x8] sm:$0xff] %v398
    // Predicated region
    $region30: #{tpu_custom_call.1} parent=1 // pred_check
      _
    $region31: #{tpu_custom_call.1} parent=1 // pred_check_branch
      %402 = sbr.rel (0) target = $region33
    $region32: #{tpu_custom_call.1} parent=1 // pred_region
      %404 = vsyncadd [#allocation4], 0
      %s405 = sshll.u32 [#allocation8], 4
      %s406 = int_to_ptr.vmem [resolvable:$true] %s405
      %s407 = sshll.u32 %s4, 4
      %s408 = int_to_ptr.hbm [resolvable:$true] %s407
      %413 = dma.vmem_to_hbm [thread:$0]  %s406, 256, %s408, [#allocation4], 128, 128, 8
    $region33: #{tpu_custom_call.1} parent=1 // pred_fallthru
      _
    // Predicated region
    $region34: #{tpu_custom_call.1} parent=1 // pred_check
      _
    $region35: #{tpu_custom_call.1} parent=1 // pred_check_branch
      %415 = sbr.rel (0) target = $region37
    $region36: #{tpu_custom_call.1} parent=1 // pred_region
      %417 = dma.done [#allocation4], 256
    $region37: #{tpu_custom_call.1} parent=1 // pred_fallthru
      _
    %418 = vsyncpa [#allocation3], 1
    %419 = vsyncpa [#allocation6], 1
    %420 = vsyncpa [#allocation4], 1

</llo_original>
